<compile_context>
chip_gen: v6e
topology: v6e:2x2x1
jax: 0.10.0
libtpu: 0.0.40
codegen_flags: <defaults>
</compile_context>

<pallas_src>
import functools

import jax
import jax.numpy as jnp
from jax import lax
from jax.experimental import pallas as pl
from jax.experimental.pallas import tpu as pltpu

LANE = 128


def _round_up(n, m):
    return ((n + m - 1) // m) * m


def _pick_chunk(T, max_chunk=128):
    """Largest divisor of T that is <= max_chunk (chunk of timesteps per grid step)."""
    for c in range(min(T, max_chunk), 0, -1):
        if T % c == 0:
            return c
    return 1


# ----------------------------------------------------------------------------
# Kernel: one grid step == Tc RNN timesteps (in-kernel fori_loop).
# Refs: xw (Tc, B, HP+OP)  precomputed x-projection incl. bias
#       h0 (B, HP)         padded initial hidden
#       wh (HP, HP+OP)     folded recurrent weight
#  -> out (Tc, B, OP)      log-softmax outputs for the chunk
#     hcarry (B, HP)       resident hidden carry (constant index_map)
# ----------------------------------------------------------------------------
def rnn_chunk_kernel(xw_ref, h0_ref, wh_ref, out_ref, hcarry_ref, *, hp, tc):
    c = pl.program_id(0)

    @pl.when(c == 0)
    def _init():
        hcarry_ref[...] = h0_ref[...]

    # Loop-invariant: weight load hoisted out of the recurrence.
    wh = wh_ref[...]  # (HP, HP+OP)

    def step(t, h):
        # s = [hidden | o2o-output]; bias + x-projection already folded into xw.
        s = xw_ref[t] + jnp.dot(h, wh, preferred_element_type=jnp.float32)
        o = s[:, hp:]                                     # (B, OP)
        # Dropout(p=0.1): identity in eval mode.
        # TODO(synk): training-mode dropout would use pltpu.prng_random_bits.
        # LogSoftmax(dim=0): over the batch axis, independently per lane.
        m = jnp.max(o, axis=0, keepdims=True)
        lse = m + jnp.log(jnp.sum(jnp.exp(o - m), axis=0, keepdims=True))
        out_ref[t] = o - lse
        return s[:, :hp]                                  # new hidden (B, HP)

    unroll = True if tc <= 32 else 8
    hcarry_ref[...] = lax.fori_loop(0, tc, step, hcarry_ref[...], unroll=unroll)


# ----------------------------------------------------------------------------
# Wrappers
# ----------------------------------------------------------------------------
def rnn_forward_seq(x_seq, h0, packed, hidden_size, output_size, max_chunk=128):
    """Run T recurrent steps; returns (log-softmax outputs (T,B,O), final hidden (B,H))."""
    T, B, input_size = x_seq.shape
    wx, wh, b = packed["wx"], packed["wh"], packed["b"]
    HP = wh.shape[0]
    N = wh.shape[1]
    OP = N - HP

    # Hoisted input projection + bias: one well-shaped matmul (M = T*B, K = I).
    xw = (x_seq.reshape(T * B, input_size) @ wx + b).reshape(T, B, N)

    h0_pad = jnp.zeros((B, HP), jnp.float32).at[:, :hidden_size].set(h0)

    Tc = _pick_chunk(T, max_chunk)
    num_chunks = T // Tc

    kernel = functools.partial(rnn_chunk_kernel, hp=HP, tc=Tc)

    out_pad, h_pad = pl.pallas_call(
        kernel,
        out_shape=(
            jax.ShapeDtypeStruct((T, B, OP), jnp.float32),
            jax.ShapeDtypeStruct((B, HP), jnp.float32),
        ),
        grid_spec=pltpu.PrefetchScalarGridSpec(
            num_scalar_prefetch=0,
            grid=(num_chunks,),
            in_specs=[
                pl.BlockSpec((Tc, B, N), lambda c: (c, 0, 0)),   # xw chunk
                pl.BlockSpec((B, HP), lambda c: (0, 0)),         # h0 (resident)
                pl.BlockSpec((HP, N), lambda c: (0, 0)),         # Wh (resident)
            ],
            out_specs=[
                pl.BlockSpec((Tc, B, OP), lambda c: (c, 0, 0)),  # output slab
                pl.BlockSpec((B, HP), lambda c: (0, 0)),         # hidden carry
            ],
        ),
        compiler_params=pltpu.CompilerParams(
            dimension_semantics=("arbitrary",),  # recurrent chunk axis
        ),
    )(xw, h0_pad, wh)

    return out_pad[:, :, :output_size], h_pad[:, :hidden_size]


def rnn_forward(x, h, packed, hidden_size, output_size):
    """Single step, matching RNN.forward(input, hidden) -> (output, hidden)."""
    out_seq, h_new = rnn_forward_seq(x[None], h, packed, hidden_size, output_size)
    return out_seq[0], h_new


# ----------------------------------------------------------------------------
# Parameter init (torch.nn.Linear-style) and host-side packing + o2o fold
# ----------------------------------------------------------------------------
def init_raw_params(key, input_size, hidden_size, output_size):
    ks = jax.random.split(key, 6)

    def lin(kw, kb, fan_in, fan_out):
        bound = 1.0 / jnp.sqrt(fan_in)
        w = jax.random.uniform(kw, (fan_out, fan_in), jnp.float32, -bound, bound)
        b = jax.random.uniform(kb, (fan_out,), jnp.float32, -bound, bound)
        return w, b

    w_i2h, b_i2h = lin(ks[0], ks[1], input_size + hidden_size, hidden_size)
    w_i2o, b_i2o = lin(ks[2], ks[3], input_size + hidden_size, output_size)
    w_o2o, b_o2o = lin(ks[4], ks[5], hidden_size + output_size, output_size)
    return (w_i2h, b_i2h, w_i2o, b_i2o, w_o2o, b_o2o)


def pack_params(raw, input_size, hidden_size, output_size):
    """Fuse i2h/i2o, pad to 128 lanes, then fold the o2o Linear into stage 1.

      s = x @ Wx + h @ Wh + b          (bias b is later folded into xw)
      hidden = s[:, :HP],  output (pre log-softmax) = s[:, HP:]

    All padding is exact zeros so padded lanes stay zero through the recurrence.
    """
    w_i2h, b_i2h, w_i2o, b_i2o, w_o2o, b_o2o = raw
    HP = _round_up(hidden_size, LANE)
    OP = _round_up(output_size, LANE)
    W1N = HP + OP

    # Stage-1 fused [hidden | i2o-output] weights (padded).
    w1x = jnp.zeros((input_size, W1N), jnp.float32)
    w1x = w1x.at[:, :hidden_size].set(w_i2h[:, :input_size].T)
    w1x = w1x.at[:, HP:HP + output_size].set(w_i2o[:, :input_size].T)

    w1h = jnp.zeros((HP, W1N), jnp.float32)
    w1h = w1h.at[:hidden_size, :hidden_size].set(w_i2h[:, input_size:].T)
    w1h = w1h.at[:hidden_size, HP:HP + output_size].set(w_i2o[:, input_size:].T)

    b1 = jnp.zeros((1, W1N), jnp.float32)
    b1 = b1.at[0, :hidden_size].set(b_i2h)
    b1 = b1.at[0, HP:HP + output_size].set(b_i2o)

    # Stage-2 (o2o) weights (padded).
    w2 = jnp.zeros((W1N, OP), jnp.float32)
    w2 = w2.at[:hidden_size, :output_size].set(w_o2o[:, :hidden_size].T)
    w2 = w2.at[HP:HP + output_size, :output_size].set(w_o2o[:, hidden_size:].T)

    b2 = jnp.zeros((1, OP), jnp.float32)
    b2 = b2.at[0, :output_size].set(b_o2o)

    # Fold o2o into stage 1 (no nonlinearity in between):
    #   out = x @ (W1x @ W2) + h @ (W1h @ W2) + (b1 @ W2 + b2)
    wx = jnp.concatenate([w1x[:, :HP], w1x @ w2], axis=1)      # (I,  HP+OP)
    wh = jnp.concatenate([w1h[:, :HP], w1h @ w2], axis=1)      # (HP, HP+OP)
    b = jnp.concatenate([b1[:, :HP], b1 @ w2 + b2], axis=1)    # (1,  HP+OP)

    return {"wx": wx, "wh": wh, "b": b}


# ----------------------------------------------------------------------------
# Pure-JAX reference (matches the PyTorch forward, eval-mode dropout)
# ----------------------------------------------------------------------------
def rnn_step_ref(x, h, raw):
    w_i2h, b_i2h, w_i2o, b_i2o, w_o2o, b_o2o = raw
    combined = jnp.concatenate([x, h], axis=1)
    hidden = combined @ w_i2h.T + b_i2h
    output = combined @ w_i2o.T + b_i2o
    combined2 = jnp.concatenate([hidden, output], axis=1)
    output = combined2 @ w_o2o.T + b_o2o
    output = jax.nn.log_softmax(output, axis=0)
    return output, hidden


def rnn_seq_ref(x_seq, h0, raw):
    outs = []
    h = h0
    for t in range(x_seq.shape[0]):
        o, h = rnn_step_ref(x_seq[t], h, raw)
        outs.append(o)
    return jnp.stack(outs, axis=0), h


if __name__ == "__main__":
    T, B = 8, 8
    input_size, hidden_size, output_size = 16, 32, 16

    key = jax.random.PRNGKey(0)
    k_x, k_p = jax.random.split(key, 2)
    x_seq = jax.random.normal(k_x, (T, B, input_size), jnp.float32)
    h0 = jnp.zeros((B, hidden_size), jnp.float32)  # initHidden(B)

    raw = init_raw_params(k_p, input_size, hidden_size, output_size)
    packed = pack_params(raw, input_size, hidden_size, output_size)

    # Single step (exactly RNN.forward semantics).
    out1, hid1 = rnn_forward(x_seq[0], h0, packed, hidden_size, output_size)
    # Full sequence: one pallas_call, T loop inside the kernel.
    out_seq, hid_T = rnn_forward_seq(x_seq, h0, packed, hidden_size, output_size)
    out1, hid1, out_seq, hid_T = jax.block_until_ready((out1, hid1, out_seq, hid_T))

    ref_out1, ref_hid1 = rnn_step_ref(x_seq[0], h0, raw)
    ref_out_seq, ref_hid_T = rnn_seq_ref(x_seq, h0, raw)

    assert jnp.allclose(out1, ref_out1, atol=1e-4, rtol=1e-4)
    assert jnp.allclose(hid1, ref_hid1, atol=1e-4, rtol=1e-4)
    assert jnp.allclose(out_seq, ref_out_seq, atol=1e-4, rtol=1e-4)
    assert jnp.allclose(hid_T, ref_hid_T, atol=1e-4, rtol=1e-4)

    print("KERNEL_OK")
</pallas_src>

<mosaic_0001>
module attributes {stable_mosaic.version = 11 : i64} {
  func.func @rnn_chunk_kernel(%arg0: i32, %arg1: memref<1x8x256xf32, #tpu.memory_space<vmem>>, %arg2: memref<8x128xf32, #tpu.memory_space<vmem>>, %arg3: memref<128x256xf32, #tpu.memory_space<vmem>>, %arg4: memref<1x8x128xf32, #tpu.memory_space<vmem>>, %arg5: memref<8x128xf32, #tpu.memory_space<vmem>>) attributes {dimension_semantics = [#tpu.dimension_semantics<arbitrary>], iteration_bounds = array<i64: 1>, scalar_prefetch = 0 : i64, scratch_operands = 0 : i64, tpu.core_type = #tpu.core_type<tc>, window_params = [{transform_indices = @transform_0, window_bounds = array<i64: 1, 8, 256>}, {pipeline_mode = #tpu.pipeline_mode<synchronous>, transform_indices = @transform_1, window_bounds = array<i64: 8, 128>}, {pipeline_mode = #tpu.pipeline_mode<synchronous>, transform_indices = @transform_2, window_bounds = array<i64: 128, 256>}, {transform_indices = @transform_3, window_bounds = array<i64: 1, 8, 128>}, {pipeline_mode = #tpu.pipeline_mode<synchronous>, transform_indices = @transform_4, window_bounds = array<i64: 8, 128>}]} {
    %c0_i32 = arith.constant 0 : i32
    %0 = arith.cmpi eq, %arg0, %c0_i32 : i32
    %1 = arith.extui %0 : i1 to i32
    %c0_i32_0 = arith.constant 0 : i32
    %2 = arith.cmpi ne, %1, %c0_i32_0 : i32
    scf.if %2 {
      %c0_13 = arith.constant 0 : index
      %c0_14 = arith.constant 0 : index
      %28 = vector.load %arg2[%c0_13, %c0_14] : memref<8x128xf32, #tpu.memory_space<vmem>>, vector<8x128xf32>
      %c0_15 = arith.constant 0 : index
      %c0_16 = arith.constant 0 : index
      %29 = vector.load %arg5[%c0_15, %c0_16] : memref<8x128xf32, #tpu.memory_space<vmem>>, vector<8x128xf32>
      tpu.vector_store %arg5[%c0_15, %c0_16], %28 {strides = array<i32>} : memref<8x128xf32, #tpu.memory_space<vmem>>, vector<8x128xf32>,
    } else {
    }
    %c0 = arith.constant 0 : index
    %c0_1 = arith.constant 0 : index
    %3 = vector.load %arg3[%c0, %c0_1] : memref<128x256xf32, #tpu.memory_space<vmem>>, vector<128x256xf32>
    %c0_2 = arith.constant 0 : index
    %c0_3 = arith.constant 0 : index
    %4 = vector.load %arg5[%c0_2, %c0_3] : memref<8x128xf32, #tpu.memory_space<vmem>>, vector<8x128xf32>
    %c0_i32_4 = arith.constant 0 : i32
    %5 = arith.index_cast %c0_i32_4 : i32 to index
    %c0_5 = arith.constant 0 : index
    %c0_6 = arith.constant 0 : index
    %6 = vector.load %arg1[%5, %c0_5, %c0_6] : memref<1x8x256xf32, #tpu.memory_space<vmem>>, vector<1x8x256xf32>
    %7 = vector.shape_cast %6 : vector<1x8x256xf32> to vector<8x256xf32>
    %cst = arith.constant dense<0.000000e+00> : vector<8x256xf32>
    %8 = tpu.matmul %4, %3, %cst {dimension_numbers = #tpu.dot_dimension_numbers<[1], [0], [0], [1], [0, 0, 1, 1], [], []>} : vector<8x128xf32>, vector<128x256xf32>, vector<8x256xf32> -> vector<8x256xf32>
    %9 = arith.addf %7, %8 : vector<8x256xf32>
    %10 = vector.extract_strided_slice %9 {offsets = [0, 128], sizes = [8, 128], strides = [1, 1]} : vector<8x256xf32> to vector<8x128xf32>
    %cst_7 = arith.constant dense<0xFF800000> : vector<128xf32>
    %11 = vector.multi_reduction <maximumf>, %10, %cst_7 [0] : vector<8x128xf32> to vector<128xf32>
    %12 = vector.shape_cast %11 : vector<128xf32> to vector<1x128xf32>
    %13 = vector.broadcast %12 : vector<1x128xf32> to vector<8x128xf32>
    %14 = arith.subf %10, %13 : vector<8x128xf32>
    %15 = math.exp %14 : vector<8x128xf32>
    %cst_8 = arith.constant dense<0.000000e+00> : vector<128xf32>
    %16 = vector.multi_reduction <add>, %15, %cst_8 [0] : vector<8x128xf32> to vector<128xf32>
    %17 = vector.shape_cast %16 : vector<128xf32> to vector<1x128xf32>
    %18 = math.log %17 : vector<1x128xf32>
    %19 = arith.addf %12, %18 : vector<1x128xf32>
    %20 = vector.broadcast %19 : vector<1x128xf32> to vector<8x128xf32>
    %21 = arith.subf %10, %20 : vector<8x128xf32>
    %22 = arith.index_cast %c0_i32_4 : i32 to index
    %c0_9 = arith.constant 0 : index
    %c0_10 = arith.constant 0 : index
    %23 = vector.load %arg4[%22, %c0_9, %c0_10] : memref<1x8x128xf32, #tpu.memory_space<vmem>>, vector<1x8x128xf32>
    %24 = vector.shape_cast %23 : vector<1x8x128xf32> to vector<8x128xf32>
    %25 = vector.shape_cast %21 : vector<8x128xf32> to vector<1x8x128xf32>
    tpu.vector_store %arg4[%22, %c0_9, %c0_10], %25 {strides = array<i32>} : memref<1x8x128xf32, #tpu.memory_space<vmem>>, vector<1x8x128xf32>,
    %26 = vector.extract_strided_slice %9 {offsets = [0, 0], sizes = [8, 128], strides = [1, 1]} : vector<8x256xf32> to vector<8x128xf32>
    %c1_i32 = arith.constant 1 : i32
    %c0_11 = arith.constant 0 : index
    %c0_12 = arith.constant 0 : index
    %27 = vector.load %arg5[%c0_11, %c0_12] : memref<8x128xf32, #tpu.memory_space<vmem>>, vector<8x128xf32>
    tpu.vector_store %arg5[%c0_11, %c0_12], %26 {strides = array<i32>} : memref<8x128xf32, #tpu.memory_space<vmem>>, vector<8x128xf32>,
    return
  }
  func.func @transform_0(%arg0: i32) -> (i32, i32, i32) {
    %c0_i32 = arith.constant 0 : i32
    %c0_i32_0 = arith.constant 0 : i32
    %c0_i32_1 = arith.constant 0 : i32
    return %arg0, %c0_i32, %c0_i32_0 : i32, i32, i32
  }
  func.func @transform_1(%arg0: i32) -> (i32, i32) {
    %c0_i32 = arith.constant 0 : i32
    %c0_i32_0 = arith.constant 0 : i32
    %c0_i32_1 = arith.constant 0 : i32
    return %c0_i32, %c0_i32_0 : i32, i32
  }
  func.func @transform_2(%arg0: i32) -> (i32, i32) {
    %c0_i32 = arith.constant 0 : i32
    %c0_i32_0 = arith.constant 0 : i32
    %c0_i32_1 = arith.constant 0 : i32
    return %c0_i32, %c0_i32_0 : i32, i32
  }
  func.func @transform_3(%arg0: i32) -> (i32, i32, i32) {
    %c0_i32 = arith.constant 0 : i32
    %c0_i32_0 = arith.constant 0 : i32
    %c0_i32_1 = arith.constant 0 : i32
    return %arg0, %c0_i32, %c0_i32_0 : i32, i32, i32
  }
  func.func @transform_4(%arg0: i32) -> (i32, i32) {
    %c0_i32 = arith.constant 0 : i32
    %c0_i32_0 = arith.constant 0 : i32
    %c0_i32_1 = arith.constant 0 : i32
    return %c0_i32, %c0_i32_0 : i32, i32
  }
}

</mosaic_0001>

<llo_original>
// kernel: tpu_custom_call.1
$region0: #{tpu_custom_call.1}
  #allocation0 [shape = 'u32[]', space=smem, size = 0x4, offset = 0x4, fixed_abs, tag = 'smem constant byte address 0x4 - core index']
  #allocation1 [shape = 'u32[144,128]{1,0:T(1,128)}', space=vmem, size = 0x12000, scoped, tag = 'internal scratch']
  %s0 = inlined_call_operand.hbm [shape: f32[1,8,256], index: 0, kind: input, shape index: {}]
  %s1 = inlined_call_operand.hbm [shape: f32[8,128], index: 1, kind: input, shape index: {}]
  %s2 = inlined_call_operand.hbm [shape: f32[128,256], index: 2, kind: input, shape index: {}]
  %s3 = inlined_call_operand.hbm [shape: f32[1,8,128], index: 3, kind: output, shape index: {0}]
  %s4 = inlined_call_operand.hbm [shape: f32[8,128], index: 4, kind: output, shape index: {1}]
  %5 = xla_tuple %s3, %s4
  %s6 = sld [smem:[#allocation0]]
  $region46: #{tpu_custom_call.1} parent=0
    _
  %s8 = ssub.s32 1, %s6
  %s9 = scalar_select 0, %s8, %s6
  $region1: #{tpu_custom_call.1} parent=0
    #allocation2 [shape = 'u8[8192]{0}', space=vmem, size = 0x2000, scoped, tag = 'input window, operand 0, single buffered']
    #allocation3 [shape = 's32[1]{0}', space=sflag, size = 0x4, scoped, tag = 'scoped memory for tpu_custom_call.1']
    #allocation4 [shape = 's32[1]{0}', space=sflag, size = 0x4, scoped, tag = 'scoped memory for tpu_custom_call.1']
    #allocation5 [shape = 'u8[4096]{0}', space=vmem, size = 0x1000, scoped, tag = 'input window, operand 1, single buffered']
    #allocation6 [shape = 's32[1]{0}', space=sflag, size = 0x4, scoped, tag = 'scoped memory for tpu_custom_call.1']
    #allocation7 [shape = 'u8[131072]{0}', space=vmem, size = 0x20000, scoped, tag = 'input window, operand 2, single buffered']
    #allocation8 [shape = 'u8[4096]{0}', space=vmem, size = 0x1000, scoped, tag = 'output window, operand 0, single buffered']
    #allocation9 [shape = 'u8[4096]{0}', space=vmem, size = 0x1000, scoped, tag = 'output window, operand 1, single buffered']
    #allocation10 [shape = 's32[1]{0}', space=sflag, size = 0x4, scoped, tag = 'scoped memory for tpu_custom_call.1']
    %10 = vsyncpa [#allocation3], 0
    %11 = vsyncpa [#allocation6], 0
    %12 = vsyncpa [#allocation4], 0
    %13 = vsyncpa [#allocation10], 0
    // Predicated region
    $region2: #{tpu_custom_call.1} parent=1 // pred_check
      _
    $region3: #{tpu_custom_call.1} parent=1 // pred_check_branch
      %15 = sbr.rel (0) target = $region5
    $region4: #{tpu_custom_call.1} parent=1 // pred_region
      %s17 = ssub.s32 256, 256
      %18 = vsyncadd [#allocation3], %s17
      %s20 = sshll.u32 [#allocation2], 4
      %s21 = int_to_ptr.vmem [resolvable:$true] %s20
      %23 = dma.hbm_to_vmem [thread:$0]  %s0, 256, %s21, [#allocation3]
    $region5: #{tpu_custom_call.1} parent=1 // pred_fallthru
      _
    // Predicated region
    $region6: #{tpu_custom_call.1} parent=1 // pred_check
      _
    $region7: #{tpu_custom_call.1} parent=1 // pred_check_branch
      %25 = sbr.rel (0) target = $region9
    $region8: #{tpu_custom_call.1} parent=1 // pred_region
      %s27 = ssub.s32 128, 128
      %28 = vsyncadd [#allocation6], %s27
      %s30 = sshll.u32 [#allocation5], 4
      %s31 = int_to_ptr.vmem [resolvable:$true] %s30
      %33 = dma.hbm_to_vmem [thread:$0]  %s1, 128, %s31, [#allocation6]
    $region9: #{tpu_custom_call.1} parent=1 // pred_fallthru
      _
    // Predicated region
    $region10: #{tpu_custom_call.1} parent=1 // pred_check
      _
    $region11: #{tpu_custom_call.1} parent=1 // pred_check_branch
      %35 = sbr.rel (0) target = $region13
    $region12: #{tpu_custom_call.1} parent=1 // pred_region
      %s37 = ssub.s32 4096, 4096
      %38 = vsyncadd [#allocation6], %s37
      %s39 = sshll.u32 [#allocation7], 4
      %s40 = int_to_ptr.vmem [resolvable:$true] %s39
      %45 = dma.hbm_to_vmem [thread:$0]  %s2, 4096, %s40, [#allocation6], 256, 256, 16
    $region13: #{tpu_custom_call.1} parent=1 // pred_fallthru
      _
    // Predicated region
    $region14: #{tpu_custom_call.1} parent=1 // pred_check
      _
    $region15: #{tpu_custom_call.1} parent=1 // pred_check_branch
      %47 = sbr.rel (0) target = $region17
    $region16: #{tpu_custom_call.1} parent=1 // pred_region
      %48 = dma.done [#allocation3], 256
    $region17: #{tpu_custom_call.1} parent=1 // pred_fallthru
      _
    // Predicated region
    $region18: #{tpu_custom_call.1} parent=1 // pred_check
      _
    $region19: #{tpu_custom_call.1} parent=1 // pred_check_branch
      %50 = sbr.rel (0) target = $region21
    $region20: #{tpu_custom_call.1} parent=1 // pred_region
      %51 = dma.done [#allocation6], 128
    $region21: #{tpu_custom_call.1} parent=1 // pred_fallthru
      _
    // Predicated region
    $region22: #{tpu_custom_call.1} parent=1 // pred_check
      _
    $region23: #{tpu_custom_call.1} parent=1 // pred_check_branch
      %53 = sbr.rel (0) target = $region25
    $region24: #{tpu_custom_call.1} parent=1 // pred_region
      %54 = dma.done [#allocation6], 4096
    $region25: #{tpu_custom_call.1} parent=1 // pred_fallthru
      _
    %p55 = scmp.eq.s32.totalorder 0, 0
    // Predicated region
    $region26: #{tpu_custom_call.1} parent=1 // pred_check
      %p56 = pneg %p55
    $region27: #{tpu_custom_call.1} parent=1 // pred_check_branch
      %58 = sbr.rel (%p56) target = $region29
    $region28: #{tpu_custom_call.1} parent=1 // pred_region
      %v59 = vld [vmem:[#allocation5] sm:$0xff]
      %60 = vst [vmem:[#allocation9] sm:$0xff] %v59
    $region29: #{tpu_custom_call.1} parent=1 // pred_fallthru
      _
    %v61 = vld [vmem:[#allocation7] sm:$0xff]
    %v62 = vld [vmem:[#allocation7 + $0x8] sm:$0xff]
    %v63 = vld [vmem:[#allocation7 + $0x10] sm:$0xff]
    %v64 = vld [vmem:[#allocation7 + $0x18] sm:$0xff]
    %v65 = vld [vmem:[#allocation7 + $0x20] sm:$0xff]
    %v66 = vld [vmem:[#allocation7 + $0x28] sm:$0xff]
    %v67 = vld [vmem:[#allocation7 + $0x30] sm:$0xff]
    %v68 = vld [vmem:[#allocation7 + $0x38] sm:$0xff]
    %v69 = vld [vmem:[#allocation7 + $0x40] sm:$0xff]
    %v70 = vld [vmem:[#allocation7 + $0x48] sm:$0xff]
    %v71 = vld [vmem:[#allocation7 + $0x50] sm:$0xff]
    %v72 = vld [vmem:[#allocation7 + $0x58] sm:$0xff]
    %v73 = vld [vmem:[#allocation7 + $0x60] sm:$0xff]
    %v74 = vld [vmem:[#allocation7 + $0x68] sm:$0xff]
    %v75 = vld [vmem:[#allocation7 + $0x70] sm:$0xff]
    %v76 = vld [vmem:[#allocation7 + $0x78] sm:$0xff]
    %v77 = vld [vmem:[#allocation7 + $0x80] sm:$0xff]
    %v78 = vld [vmem:[#allocation7 + $0x88] sm:$0xff]
    %v79 = vld [vmem:[#allocation7 + $0x90] sm:$0xff]
    %v80 = vld [vmem:[#allocation7 + $0x98] sm:$0xff]
    %v81 = vld [vmem:[#allocation7 + $0xa0] sm:$0xff]
    %v82 = vld [vmem:[#allocation7 + $0xa8] sm:$0xff]
    %v83 = vld [vmem:[#allocation7 + $0xb0] sm:$0xff]
    %v84 = vld [vmem:[#allocation7 + $0xb8] sm:$0xff]
    %v85 = vld [vmem:[#allocation7 + $0xc0] sm:$0xff]
    %v86 = vld [vmem:[#allocation7 + $0xc8] sm:$0xff]
    %v87 = vld [vmem:[#allocation7 + $0xd0] sm:$0xff]
    %v88 = vld [vmem:[#allocation7 + $0xd8] sm:$0xff]
    %v89 = vld [vmem:[#allocation7 + $0xe0] sm:$0xff]
    %v90 = vld [vmem:[#allocation7 + $0xe8] sm:$0xff]
    %v91 = vld [vmem:[#allocation7 + $0xf0] sm:$0xff]
    %v92 = vld [vmem:[#allocation7 + $0xf8] sm:$0xff]
    %v93 = vld [vmem:[#allocation9] sm:$0xff]
    %v94 = vld [vmem:[#allocation2] sm:$0xff]
    %v95 = vld [vmem:[#allocation2 + $0x8] sm:$0xff]
    %96 = vmatprep.subr.mxu0 %v92
    %97 = vmatpush1.msra.mxu0 %v91
    %98 = vmatprep.subr.mxu0 %v90
    %99 = vmatpush1.msra.mxu0 %v89
    %100 = vmatprep.subr.mxu0 %v88
    %101 = vmatpush1.msra.mxu0 %v87
    %102 = vmatprep.subr.mxu0 %v86
    %103 = vmatpush1.msra.mxu0 %v85
    %104 = vmatprep.subr.mxu0 %v84
    %105 = vmatpush1.msra.mxu0 %v83
    %106 = vmatprep.subr.mxu0 %v82
    %107 = vmatpush1.msra.mxu0 %v81
    %108 = vmatprep.subr.mxu0 %v80
    %109 = vmatpush1.msra.mxu0 %v79
    %110 = vmatprep.subr.mxu0 %v78
    %111 = vmatpush1.msra.mxu0 %v77
    %112 = vmatprep.subr.mxu0 %v76
    %113 = vmatpush1.msra.mxu0 %v75
    %114 = vmatprep.subr.mxu0 %v74
    %115 = vmatpush1.msra.mxu0 %v73
    %116 = vmatprep.subr.mxu0 %v72
    %117 = vmatpush1.msra.mxu0 %v71
    %118 = vmatprep.subr.mxu0 %v70
    %119 = vmatpush1.msra.mxu0 %v69
    %120 = vmatprep.subr.mxu0 %v68
    %121 = vmatpush1.msra.mxu0 %v67
    %122 = vmatprep.subr.mxu0 %v66
    %123 = vmatpush1.msra.mxu0 %v65
    %124 = vmatprep.subr.mxu0 %v64
    %125 = vmatpush1.msra.mxu0 %v63
    %126 = vmatprep.subr.mxu0 %v62
    %127 = vmatpush1.msra.mxu0 %v61
    %128 = vmatprep.subr.mxu0 0.0
    %129 = vmatpush2.msra.mxu0 0.0
    %130 = vmatprep.subr.mxu0 0.0
    %131 = vmatpush2.msra.mxu0 0.0
    %132 = vmatprep.subr.mxu0 0.0
    %133 = vmatpush2.msra.mxu0 0.0
    %134 = vmatprep.subr.mxu0 0.0
    %135 = vmatpush2.msra.mxu0 0.0
    %136 = vmatprep.subr.mxu0 0.0
    %137 = vmatpush2.msra.mxu0 0.0
    %138 = vmatprep.subr.mxu0 0.0
    %139 = vmatpush2.msra.mxu0 0.0
    %140 = vmatprep.subr.mxu0 0.0
    %141 = vmatpush2.msra.mxu0 0.0
    %142 = vmatprep.subr.mxu0 0.0
    %143 = vmatpush2.msra.mxu0 0.0
    %144 = vmatprep.subr.mxu0 0.0
    %145 = vmatpush2.msra.mxu0 0.0
    %146 = vmatprep.subr.mxu0 0.0
    %147 = vmatpush2.msra.mxu0 0.0
    %148 = vmatprep.subr.mxu0 0.0
    %149 = vmatpush2.msra.mxu0 0.0
    %150 = vmatprep.subr.mxu0 0.0
    %151 = vmatpush2.msra.mxu0 0.0
    %152 = vmatprep.subr.mxu0 0.0
    %153 = vmatpush2.msra.mxu0 0.0
    %154 = vmatprep.subr.mxu0 0.0
    %155 = vmatpush2.msra.mxu0 0.0
    %156 = vmatprep.subr.mxu0 0.0
    %157 = vmatpush2.msra.mxu0 0.0
    %158 = vmatprep.subr.mxu0 0.0
    %159 = vmatpush2.msra.mxu0 0.0
    %160 = vmatprep.mubr.f32.mxu0 0.0
    %161 = vmatmul.mubr.f32.gmra.mxu0 %v93
    %v162 = vpop.f32.mrf.mxu0
    %v163 = vadd.f32 0.0, %v162
    %v164 = vpop.f32.mrf.mxu0
    %v165 = vadd.f32 0.0, %v164
    %166 = vdwg.mxu0
    %v167 = vadd.f32 %v94, %v163
    %v168 = vadd.f32 %v95, %v165
    %v169 = vrot.slane %v168, 4
    %v170 = vmax.f32 %v168, %v169
    %v171 = vrot.slane %v170, 2
    %v172 = vmax.f32 %v170, %v171
    %v173 = vrot.slane %v172, 1
    %v174 = vmax.f32 %v172, %v173
    %v175 = vsub.f32 %v168, %v174
    %v176 = vmul.f32 %v175, 1.442695
    %v177 = vpow.pop %v176
    %v178 = vrot.slane %v177, 4
    %v179 = vadd.f32 %v177, %v178
    %v180 = vrot.slane %v179, 2
    %v181 = vadd.f32 %v179, %v180
    %v182 = vrot.slane %v181, 1
    %v183 = vadd.f32 %v181, %v182
    %v184 = vlog2.pop %v183
    %v185 = vmul.f32 %v184, 0.6931472
    %v186 = vadd.f32 %v174, %v185
    %v187 = vsub.f32 %v168, %v186
    %188 = vst [vmem:[#allocation8] sm:$0xff] %v187
    %189 = vst [vmem:[#allocation9] sm:$0xff] %v167
    // Predicated region
    $region30: #{tpu_custom_call.1} parent=1 // pred_check
      _
    $region31: #{tpu_custom_call.1} parent=1 // pred_check_branch
      %191 = sbr.rel (0) target = $region33
    $region32: #{tpu_custom_call.1} parent=1 // pred_region
      %s193 = ssub.s32 128, 128
      %194 = vsyncadd [#allocation4], %s193
      %s196 = sshll.u32 [#allocation8], 4
      %s197 = int_to_ptr.vmem [resolvable:$true] %s196
      %199 = dma.vmem_to_hbm [thread:$0]  %s197, 128, %s3, [#allocation4]
    $region33: #{tpu_custom_call.1} parent=1 // pred_fallthru
      _
    // Predicated region
    $region34: #{tpu_custom_call.1} parent=1 // pred_check
      _
    $region35: #{tpu_custom_call.1} parent=1 // pred_check_branch
      %201 = sbr.rel (0) target = $region37
    $region36: #{tpu_custom_call.1} parent=1 // pred_region
      %s203 = ssub.s32 128, 128
      %204 = vsyncadd [#allocation10], %s203
      %s206 = sshll.u32 [#allocation9], 4
      %s207 = int_to_ptr.vmem [resolvable:$true] %s206
      %209 = dma.vmem_to_hbm [thread:$0]  %s207, 128, %s4, [#allocation10]
    $region37: #{tpu_custom_call.1} parent=1 // pred_fallthru
      _
    // Predicated region
    $region38: #{tpu_custom_call.1} parent=1 // pred_check
      _
    $region39: #{tpu_custom_call.1} parent=1 // pred_check_branch
      %211 = sbr.rel (0) target = $region41
    $region40: #{tpu_custom_call.1} parent=1 // pred_region
      %212 = dma.done [#allocation4], 128
    $region41: #{tpu_custom_call.1} parent=1 // pred_fallthru
      _
    // Predicated region
    $region42: #{tpu_custom_call.1} parent=1 // pred_check
      _
    $region43: #{tpu_custom_call.1} parent=1 // pred_check_branch
      %214 = sbr.rel (0) target = $region45
    $region44: #{tpu_custom_call.1} parent=1 // pred_region
      %215 = dma.done [#allocation10], 128
    $region45: #{tpu_custom_call.1} parent=1 // pred_fallthru
      _
    %216 = vsyncpa [#allocation3], 1
    %217 = vsyncpa [#allocation6], 1
    %218 = vsyncpa [#allocation4], 1
    %219 = vsyncpa [#allocation10], 1

</llo_original>
